<compile_context>
chip_gen: v6e
topology: v6e:2x2x1
jax: 0.10.0
libtpu: 0.0.40
codegen_flags: <defaults>
</compile_context>

<pallas_src>
import functools

import jax
import jax.numpy as jnp
import numpy as np
from jax.experimental import pallas as pl
from jax.experimental.pallas import tpu as pltpu

DEFAULT_ROW_TILE = 256


def _round_up(x, m):
    return (x + m - 1) // m * m


def _vmem_limit_bytes():
    try:
        cap = pltpu.get_tpu_info().vmem_capacity_bytes
    except Exception:
        cap = 64 * 1024 * 1024
    return int(min(64 * 1024 * 1024, cap * 3 // 4))


# --------------------------- Pallas kernels --------------------------------- #

def rgcn_msg_kernel(x_ref, w_rel_ref, msg_ref):
    """Per-edge-type message transform: msg = x @ W_rel[t]^T (one t per step)."""
    msg_ref[...] = jnp.dot(x_ref[...], w_rel_ref[...],
                           preferred_element_type=jnp.float32
                           ).astype(msg_ref.dtype)


def rgcn_agg_kernel(msg_ref, x_dst_ref, adj_ref, w_root_ref, b_root_ref, nt_ref,
                    out_ref, acc_ref, *, num_node_types, cout_pad, cout_real,
                    apply_relu, apply_log_softmax):
    """Aggregation + fused epilogue, tiled over (dst tiles, src tiles).

    msg_ref    : (T*TS, Cout_p)      bf16  block-interleaved messages for src tile
    x_dst_ref  : (TM, Cin_p)         bf16  dst-node features (root transform)
    adj_ref    : (TM, T*TS)          bf16  permuted mean-normalized adjacency tile
    w_root_ref : (K, Cin_p, Cout_p)  bf16  per-node-type root weights ([in, out])
    b_root_ref : (K, Cout_p)         f32
    nt_ref     : (TM, K)             f32   one-hot node type of dst rows
    out_ref    : (TM, Cout_p)        bf16/f32
    acc_ref    : (TM, Cout_p)        f32   VMEM accumulator over src tiles
    """
    j = pl.program_id(1)

    @pl.when(j == 0)
    def _init():
        acc_ref[...] = jnp.zeros_like(acc_ref)

    # Single deep-K MXU matmul per grid step (K = num_edge_types * src_tile).
    acc_ref[...] += jnp.dot(adj_ref[...], msg_ref[...],
                            preferred_element_type=jnp.float32)

    @pl.when(j == pl.num_programs(1) - 1)
    def _finalize():
        x_dst = x_dst_ref[...]
        b = b_root_ref[...]
        nt = nt_ref[...]
        r = acc_ref[...]
        for k in range(num_node_types):
            rk = jnp.dot(x_dst, w_root_ref[k],
                         preferred_element_type=jnp.float32)
            r = r + nt[:, k:k + 1] * (rk + b[k:k + 1, :])
        if apply_relu:
            r = jnp.maximum(r, 0.0)
        if apply_log_softmax:
            # Fused epilogue; mask the zero-padded lanes out of max / sum.
            lane = jax.lax.broadcasted_iota(jnp.int32, r.shape, 1)
            valid = lane < cout_real
            r_m = jnp.where(valid, r, -jnp.inf)
            m = jnp.max(r_m, axis=-1, keepdims=True)
            z = jnp.exp(r_m - m)
            r = r - m - jnp.log(jnp.sum(z, axis=-1, keepdims=True))
        out_ref[...] = r.astype(out_ref.dtype)


# ------------------------------ wrappers ------------------------------------ #

def prepare_adj(adj, n_p, row_tile, compute_dtype=jnp.bfloat16):
    """Pad + permute dense adj[t, dst, src] to (dst, [src_block, t, s]) columns."""
    num_et, n, _ = adj.shape
    adj_p = jnp.pad(adj, ((0, 0), (0, n_p - n), (0, n_p - n))).astype(compute_dtype)
    sb = n_p // row_tile
    return (adj_p.reshape(num_et, n_p, sb, row_tile)
                 .transpose(1, 2, 0, 3)
                 .reshape(n_p, sb * num_et * row_tile))


def rgcn_layer(x_p, adj_cat, w_rel, w_root, b_root, nt_p, *, apply_relu,
               apply_log_softmax, row_tile=DEFAULT_ROW_TILE,
               compute_dtype=jnp.bfloat16, out_dtype=jnp.float32):
    assert row_tile % 128 == 0
    n_p, cin_p_have = x_p.shape
    num_et, cout, cin = w_rel.shape
    num_nt = w_root.shape[0]
    cin_p = _round_up(cin, 128)
    cout_p = _round_up(cout, 128)
    assert cin_p == cin_p_have
    sb = n_p // row_tile

    x_c = x_p.astype(compute_dtype)

    # Pre-transpose torch [out, in] weights to [in, out]; fuse rel weights.
    w_rel_t = jnp.transpose(w_rel, (2, 0, 1))                      # (Cin, T, Cout)
    w_rel_t = jnp.pad(w_rel_t, ((0, cin_p - cin), (0, 0), (0, cout_p - cout)))
    w_rel_cat = w_rel_t.reshape(cin_p, num_et * cout_p).astype(compute_dtype)

    w_root_t = jnp.transpose(w_root, (0, 2, 1))                    # (K, Cin, Cout)
    w_root_t = jnp.pad(w_root_t, ((0, 0), (0, cin_p - cin), (0, cout_p - cout)))
    w_root_t = w_root_t.astype(compute_dtype)                      # (K, Cin_p, Cout_p)

    b_root_p = jnp.pad(b_root, ((0, 0), (0, cout_p - cout))).astype(jnp.float32)

    vmem_limit = _vmem_limit_bytes()

    # ---- Stage 1: per-node, per-edge-type messages (once per layer). -------- #
    msg = pl.pallas_call(
        rgcn_msg_kernel,
        out_shape=jax.ShapeDtypeStruct((n_p, num_et * cout_p), compute_dtype),
        grid=(sb, num_et),
        in_specs=[
            pl.BlockSpec((row_tile, cin_p), lambda i, t: (i, 0)),
            pl.BlockSpec((cin_p, cout_p), lambda i, t: (0, t)),
        ],
        out_specs=pl.BlockSpec((row_tile, cout_p), lambda i, t: (i, t)),
        compiler_params=pltpu.CompilerParams(
            dimension_semantics=("parallel", "parallel"),
            vmem_limit_bytes=vmem_limit),
    )(x_c, w_rel_cat)

    # Re-layout messages to src-block-major (j, t, s) rows so the aggregation
    # kernel does one deep-K (= T*row_tile) matmul per grid step.
    msg_cat = (msg.reshape(sb, row_tile, num_et, cout_p)
                  .transpose(0, 2, 1, 3)
                  .reshape(sb * num_et * row_tile, cout_p))

    # ---- Stage 2: aggregation + root + epilogue. ---------------------------- #
    kernel = functools.partial(
        rgcn_agg_kernel, num_node_types=num_nt, cout_pad=cout_p, cout_real=cout,
        apply_relu=apply_relu, apply_log_softmax=apply_log_softmax)

    out = pl.pallas_call(
        kernel,
        out_shape=jax.ShapeDtypeStruct((n_p, cout_p), out_dtype),
        grid=(sb, sb),
        in_specs=[
            pl.BlockSpec((num_et * row_tile, cout_p), lambda i, j: (j, 0)),   # msg
            pl.BlockSpec((row_tile, cin_p), lambda i, j: (i, 0)),             # x dst
            pl.BlockSpec((row_tile, num_et * row_tile), lambda i, j: (i, j)), # adj
            pl.BlockSpec((num_nt, cin_p, cout_p), lambda i, j: (0, 0, 0)),    # W_root
            pl.BlockSpec((num_nt, cout_p), lambda i, j: (0, 0)),              # b_root
            pl.BlockSpec((row_tile, num_nt), lambda i, j: (i, 0)),            # node type
        ],
        out_specs=pl.BlockSpec((row_tile, cout_p), lambda i, j: (i, 0)),
        scratch_shapes=[pltpu.VMEM((row_tile, cout_p), jnp.float32)],
        compiler_params=pltpu.CompilerParams(
            dimension_semantics=("parallel", "arbitrary"),
            vmem_limit_bytes=vmem_limit),
    )(msg_cat, x_c, adj_cat, w_root_t, b_root_p, nt_p)

    return out    # padded (n_p, cout_p); caller slices


# ------------------------------- JAX glue ----------------------------------- #

def build_mean_adj(edge_index, edge_type, num_nodes, num_edge_types):
    """Dense row-normalized adjacency per edge type: adj[t, dst, src]."""
    src, dst = edge_index[0], edge_index[1]
    adj = jnp.zeros((num_edge_types, num_nodes, num_nodes), jnp.float32)
    adj = adj.at[edge_type, dst, src].add(1.0)
    deg = jnp.sum(adj, axis=2, keepdims=True)
    return adj / jnp.maximum(deg, 1.0)


def group_input(x_dict, emb_dict, node_type, local_node_idx, in_channels):
    n = node_type.shape[0]
    h = jnp.zeros((n, in_channels), jnp.float32)
    for key, x in x_dict.items():
        mask = (node_type == key)[:, None]
        idx = jnp.clip(local_node_idx, 0, x.shape[0] - 1)
        h = jnp.where(mask, x[idx], h)
    for key, emb in emb_dict.items():
        mask = (node_type == key)[:, None]
        idx = jnp.clip(local_node_idx, 0, emb.shape[0] - 1)
        h = jnp.where(mask, emb[idx], h)
    return h


def rgcn_forward(layers, x_dict, emb_dict, edge_index, edge_type,
                 node_type, local_node_idx, in_channels,
                 num_node_types, num_edge_types, row_tile=DEFAULT_ROW_TILE):
    n = node_type.shape[0]
    n_p = _round_up(n, row_tile)

    adj = build_mean_adj(edge_index, edge_type, n, num_edge_types)
    adj_cat = prepare_adj(adj, n_p, row_tile)                     # shared by layers

    nt_onehot = jax.nn.one_hot(node_type, num_node_types, dtype=jnp.float32)
    nt_p = jnp.pad(nt_onehot, ((0, n_p - n), (0, 0)))

    x = group_input(x_dict, emb_dict, node_type, local_node_idx, in_channels)
    cin_p = _round_up(in_channels, 128)
    x_p = jnp.pad(x, ((0, n_p - n), (0, cin_p - in_channels)))

    num_layers = len(layers)
    for i, layer in enumerate(layers):
        last = (i == num_layers - 1)
        x_p = rgcn_layer(x_p, adj_cat, layer['w_rel'], layer['w_root'],
                         layer['b_root'], nt_p,
                         apply_relu=not last, apply_log_softmax=last,
                         row_tile=row_tile,
                         out_dtype=jnp.float32 if last else jnp.bfloat16)
        # TODO(synk): F.dropout(p=0.5) skipped — eval mode (training=False) is identity.

    out_channels = layers[-1]['w_rel'].shape[1]
    return x_p[:n, :out_channels]


# --------------------------- deterministic init ----------------------------- #

def init_params(key, in_channels, hidden, out_channels, num_layers,
                num_node_types, num_edge_types):
    in_dims = [in_channels] + [hidden] * (num_layers - 1)
    out_dims = [hidden] * (num_layers - 1) + [out_channels]
    layers = []
    for li in range(num_layers):
        cin, cout = in_dims[li], out_dims[li]
        key, k1, k2, k3 = jax.random.split(key, 4)
        bound = 1.0 / np.sqrt(cin)
        layers.append(dict(
            w_rel=jax.random.uniform(k1, (num_edge_types, cout, cin),
                                     jnp.float32, -bound, bound),
            w_root=jax.random.uniform(k2, (num_node_types, cout, cin),
                                      jnp.float32, -bound, bound),
            b_root=jax.random.uniform(k3, (num_node_types, cout),
                                      jnp.float32, -bound, bound),
        ))
    return layers, key


# ------------------------------- reference ---------------------------------- #

def ref_layer(x, adj, w_rel, w_root, b_root, nt_onehot, apply_relu):
    acc = jnp.zeros((x.shape[0], w_rel.shape[1]), jnp.float32)
    for t in range(w_rel.shape[0]):
        acc = acc + adj[t] @ (x @ w_rel[t].T)
    for k in range(w_root.shape[0]):
        acc = acc + nt_onehot[:, k:k + 1] * (x @ w_root[k].T + b_root[k])
    return jnp.maximum(acc, 0.0) if apply_relu else acc


def ref_forward(layers, x_dict, emb_dict, edge_index, edge_type,
                node_type, local_node_idx, in_channels,
                num_node_types, num_edge_types):
    n = node_type.shape[0]
    adj = build_mean_adj(edge_index, edge_type, n, num_edge_types)
    nt_onehot = jax.nn.one_hot(node_type, num_node_types, dtype=jnp.float32)
    x = group_input(x_dict, emb_dict, node_type, local_node_idx, in_channels)
    for i, layer in enumerate(layers):
        x = ref_layer(x, adj, layer['w_rel'], layer['w_root'],
                      layer['b_root'], nt_onehot, i != len(layers) - 1)
    return jax.nn.log_softmax(x, axis=-1)


# --------------------------------- main -------------------------------------- #

if __name__ == "__main__":
    in_channels, hidden_channels, out_channels = 16, 32, 8
    num_layers = 2
    num_node_types, num_edge_types = 3, 4
    num_nodes_dict = {0: 80, 1: 60, 2: 60}   # per-type node-store sizes
    # Sampled subgraph: N > 2*row_tile so the 2-D grid, the VMEM reduction
    # accumulator and the parallel dst axis are actually exercised (grid 4x4).
    N, E = 900, 5000

    key = jax.random.PRNGKey(0)
    key, kx, ke1, ke2, knt, kidx, kei, ket = jax.random.split(key, 8)

    x_dict = {0: jax.random.normal(kx, (num_nodes_dict[0], in_channels), jnp.float32)}
    emb_dict = {}
    for k_emb, tkey in zip((ke1, ke2), (1, 2)):
        fan_in, fan_out = num_nodes_dict[tkey], in_channels
        bound = float(np.sqrt(6.0 / (fan_in + fan_out)))  # xavier uniform
        emb_dict[tkey] = jax.random.uniform(
            k_emb, (num_nodes_dict[tkey], in_channels), jnp.float32, -bound, bound)

    node_type = jax.random.randint(knt, (N,), 0, num_node_types, jnp.int32)
    local_node_idx = jax.random.randint(kidx, (N,), 0, 60, jnp.int32)
    edge_index = jax.random.randint(kei, (2, E), 0, N, jnp.int32)
    edge_type = jax.random.randint(ket, (E,), 0, num_edge_types, jnp.int32)

    layers, _ = init_params(key, in_channels, hidden_channels, out_channels,
                            num_layers, num_node_types, num_edge_types)

    out = rgcn_forward(layers, x_dict, emb_dict, edge_index, edge_type,
                       node_type, local_node_idx, in_channels,
                       num_node_types, num_edge_types)
    out = jax.block_until_ready(out)

    ref = ref_forward(layers, x_dict, emb_dict, edge_index, edge_type,
                      node_type, local_node_idx, in_channels,
                      num_node_types, num_edge_types)
    # bf16 streams (x / adj / messages / intermediate activations) vs f32
    # reference -> slightly wider tolerance.
    np.testing.assert_allclose(np.asarray(out), np.asarray(ref),
                               rtol=5e-2, atol=5e-2)
    assert out.shape == (N, out_channels)
    print("KERNEL_OK")
</pallas_src>

<mosaic_0001>
module attributes {stable_mosaic.version = 11 : i64} {
  func.func @rgcn_msg_kernel(%arg0: i32, %arg1: i32, %arg2: memref<256x128xbf16, #tpu.memory_space<vmem>>, %arg3: memref<128x128xbf16, #tpu.memory_space<vmem>>, %arg4: memref<256x128xbf16, #tpu.memory_space<vmem>>) attributes {dimension_semantics = [#tpu.dimension_semantics<parallel>, #tpu.dimension_semantics<parallel>], iteration_bounds = array<i64: 4, 4>, scalar_prefetch = 0 : i64, scratch_operands = 0 : i64, tpu.core_type = #tpu.core_type<tc>, window_params = [{transform_indices = @transform_0, window_bounds = array<i64: 256, 128>}, {transform_indices = @transform_1, window_bounds = array<i64: 128, 128>}, {transform_indices = @transform_2, window_bounds = array<i64: 256, 128>}]} {
    %c0 = arith.constant 0 : index
    %c0_0 = arith.constant 0 : index
    %0 = vector.load %arg2[%c0, %c0_0] : memref<256x128xbf16, #tpu.memory_space<vmem>>, vector<256x128xbf16>
    %c0_1 = arith.constant 0 : index
    %c0_2 = arith.constant 0 : index
    %1 = vector.load %arg3[%c0_1, %c0_2] : memref<128x128xbf16, #tpu.memory_space<vmem>>, vector<128x128xbf16>
    %cst = arith.constant dense<0.000000e+00> : vector<256x128xf32>
    %2 = tpu.matmul %0, %1, %cst {dimension_numbers = #tpu.dot_dimension_numbers<[1], [0], [0], [1], [0, 0, 1, 1], [], []>} : vector<256x128xbf16>, vector<128x128xbf16>, vector<256x128xf32> -> vector<256x128xf32>
    %3 = arith.truncf %2 : vector<256x128xf32> to vector<256x128xbf16>
    %c0_3 = arith.constant 0 : index
    %c0_4 = arith.constant 0 : index
    %4 = vector.load %arg4[%c0_3, %c0_4] : memref<256x128xbf16, #tpu.memory_space<vmem>>, vector<256x128xbf16>
    tpu.vector_store %arg4[%c0_3, %c0_4], %3 {strides = array<i32>} : memref<256x128xbf16, #tpu.memory_space<vmem>>, vector<256x128xbf16>,
    return
  }
  func.func @transform_0(%arg0: i32, %arg1: i32) -> (i32, i32) {
    %c0_i32 = arith.constant 0 : i32
    %c0_i32_0 = arith.constant 0 : i32
    return %arg0, %c0_i32 : i32, i32
  }
  func.func @transform_1(%arg0: i32, %arg1: i32) -> (i32, i32) {
    %c0_i32 = arith.constant 0 : i32
    %c0_i32_0 = arith.constant 0 : i32
    return %c0_i32, %arg1 : i32, i32
  }
  func.func @transform_2(%arg0: i32, %arg1: i32) -> (i32, i32) {
    %c0_i32 = arith.constant 0 : i32
    return %arg0, %arg1 : i32, i32
  }
}

</mosaic_0001>

<llo_original>
// kernel: tpu_custom_call.1
$region0: #{tpu_custom_call.1}
  #allocation0 [shape = 'u32[]', space=smem, size = 0x4, offset = 0x4, fixed_abs, tag = 'smem constant byte address 0x4 - core index']
  #allocation1 [shape = 'u32[144,128]{1,0:T(1,128)}', space=vmem, size = 0x12000, scoped, tag = 'internal scratch']
  %s0 = inlined_call_operand.hbm [shape: bf16[1024,128], index: 0, kind: input, shape index: {}]
  %s1 = inlined_call_operand.hbm [shape: bf16[128,512], index: 1, kind: input, shape index: {}]
  %s2 = inlined_call_operand.hbm [shape: bf16[1024,512], index: 2, kind: output, shape index: {}]
  %s3 = sld [smem:[#allocation0]]
  $region49: #{tpu_custom_call.1} parent=0
    _
  %s5 = ssub.s32 1, %s3
  %s6 = scalar_select 0, %s5, %s3
  $region1: #{tpu_custom_call.1} parent=0
    #allocation2 [shape = 'u8[131072]{0}', space=vmem, size = 0x20000, scoped, tag = 'input window, operand 0']
    #allocation3 [shape = 's32[2]{0}', space=sflag, size = 0x8, scoped, tag = 'scoped memory for tpu_custom_call.1']
    #allocation4 [shape = 's32[2]{0}', space=sflag, size = 0x8, scoped, tag = 'scoped memory for tpu_custom_call.1']
    #allocation5 [shape = 'u8[65536]{0}', space=vmem, size = 0x10000, scoped, tag = 'input window, operand 1']
    #allocation6 [shape = 's32[2]{0}', space=sflag, size = 0x8, scoped, tag = 'scoped memory for tpu_custom_call.1']
    #allocation7 [shape = 'u8[131072]{0}', space=vmem, size = 0x20000, scoped, tag = 'output window, operand 0']
    %7 = vsyncpa [#allocation3], 0
    %s8 = scalar_lea.sflag [#allocation3], 1
    %9 = vsyncpa %s8, 0
    %10 = vsyncpa [#allocation6], 0
    %s11 = scalar_lea.sflag [#allocation6], 1
    %12 = vsyncpa %s11, 0
    %13 = vsyncpa [#allocation4], 0
    %s14 = scalar_lea.sflag [#allocation4], 1
    %15 = vsyncpa %s14, 0
    loop: start=0, step=1, limit=18
    $region2: #{tpu_custom_call.1} parent=1 // loop_pre_header
      _
    $region3: #{tpu_custom_call.1} parent=1 // loop_header
      %s17 = sphi 0, %s21
      %p18 = scmp.ge.s32.totalorder %s17, 18
      %s24 = sphi 0, %s36
      %s25 = sphi 0, %s32
      %s26 = sphi 0, %s24
      %s27 = sphi 0, %s25
      %s28 = sphi 0, %s26
      %s29 = sphi 0, %s27
      %s39 = sphi 0, %s41
      %s42 = sphi 0, %s39
      %s43 = sphi 0, %s42
      %s59 = sphi 0, %s43
      %s65 = sphi 0, %s67
      %s68 = sphi 0, %s65
      %s69 = sphi 0, %s68
      %s85 = sphi 0, %s69
      %s93 = sphi 0, %s95
      %s96 = sphi 0, %s93
      %s97 = sphi 0, %s96
      %s113 = sphi 0, %s97
    $region4: #{tpu_custom_call.1} parent=1 // loop_header_branch
      %20 = sbr.rel (%p18) target = $region8
    $region5: #{tpu_custom_call.1} parent=1 // loop_body
      %s22 = ssub.s32 %s17, 1
      %s23 = ssub.s32 %s17, 2
      %s30 = sadd.s32 1, %s25
      %p31 = scmp.ge.s32.totalorder %s30, 4
      %s32 = scalar_select %p31, 0, %s30
      %s33 = sadd.s32 1, %s24
      %s34 = scalar_select %p31, %s33, %s24
      %p35 = scmp.ge.s32.totalorder %s34, 4
      %s36 = scalar_select %p35, 0, %s34
      %s37 = ssub.s32 %s24, %s36
      %p38 = scmp.eq.s32.totalorder %s37, 0
      %s40 = sadd.s32 %s39, 1
      %s41 = scalar_select %p38, %s39, %s40
      %p44 = pneg %p38
      %p45 = scmp.eq.s32.totalorder %s17, 15
      %p46 = por %p44, %p45
      %p47 = scmp.ne.s32.totalorder %s39, %s42
      %p48 = scmp.eq.s32.totalorder %s17, 0
      %p49 = por %p47, %p48
      %p50 = scmp.ne.s32.totalorder %s39, %s42
      %p51 = scmp.eq.s32.totalorder %s22, 15
      %p52 = por %p50, %p51
      %p53 = scmp.ne.s32.totalorder %s42, %s43
      %p54 = scmp.eq.s32.totalorder %s22, 0
      %p55 = por %p53, %p54
      %p56 = scmp.ne.s32.totalorder %s42, %s43
      %p57 = scmp.eq.s32.totalorder %s23, 15
      %p58 = por %p56, %p57
      %p60 = scmp.ne.s32.totalorder %s43, %s59
      %p61 = scmp.eq.s32.totalorder %s23, 0
      %p62 = por %p60, %p61
      %s63 = ssub.s32 %s25, %s32
      %p64 = scmp.eq.s32.totalorder %s63, 0
      %s66 = sadd.s32 %s65, 1
      %s67 = scalar_select %p64, %s65, %s66
      %p70 = pneg %p64
      %p71 = scmp.eq.s32.totalorder %s17, 15
      %p72 = por %p70, %p71
      %p73 = scmp.ne.s32.totalorder %s65, %s68
      %p74 = scmp.eq.s32.totalorder %s17, 0
      %p75 = por %p73, %p74
      %p76 = scmp.ne.s32.totalorder %s65, %s68
      %p77 = scmp.eq.s32.totalorder %s22, 15
      %p78 = por %p76, %p77
      %p79 = scmp.ne.s32.totalorder %s68, %s69
      %p80 = scmp.eq.s32.totalorder %s22, 0
      %p81 = por %p79, %p80
      %p82 = scmp.ne.s32.totalorder %s68, %s69
      %p83 = scmp.eq.s32.totalorder %s23, 15
      %p84 = por %p82, %p83
      %p86 = scmp.ne.s32.totalorder %s69, %s85
      %p87 = scmp.eq.s32.totalorder %s23, 0
      %p88 = por %p86, %p87
      %s89 = ssub.s32 %s24, %s36
      %s90 = ssub.s32 %s25, %s32
      %s91 = sor.u32 %s89, %s90
      %p92 = scmp.eq.s32.totalorder %s91, 0
      %s94 = sadd.s32 %s93, 1
      %s95 = scalar_select %p92, %s93, %s94
      %p98 = pneg %p92
      %p99 = scmp.eq.s32.totalorder %s17, 15
      %p100 = por %p98, %p99
      %p101 = scmp.ne.s32.totalorder %s93, %s96
      %p102 = scmp.eq.s32.totalorder %s17, 0
      %p103 = por %p101, %p102
      %p104 = scmp.ne.s32.totalorder %s93, %s96
      %p105 = scmp.eq.s32.totalorder %s22, 15
      %p106 = por %p104, %p105
      %p107 = scmp.ne.s32.totalorder %s96, %s97
      %p108 = scmp.eq.s32.totalorder %s22, 0
      %p109 = por %p107, %p108
      %p110 = scmp.ne.s32.totalorder %s96, %s97
      %p111 = scmp.eq.s32.totalorder %s23, 15
      %p112 = por %p110, %p111
      %p114 = scmp.ne.s32.totalorder %s97, %s113
      %p115 = scmp.eq.s32.totalorder %s23, 0
      %p116 = por %p114, %p115
      %p117 = scmp.le.s32.totalorder 1, %s17
      %p118 = scmp.lt.s32.totalorder %s17, 17
      %p119 = pnand %p117, %p118
      %p120 = pneg %p119
      // Predicated region
      $region9: #{tpu_custom_call.1} parent=5 // pred_check
        _
      $region10: #{tpu_custom_call.1} parent=5 // pred_check_branch
        %122 = sbr.rel (%p119) target = $region12
      $region11: #{tpu_custom_call.1} parent=5 // pred_region
        %s123 = ssub.s32 %s17, 1
      $region12: #{tpu_custom_call.1} parent=5 // pred_fallthru
        _
      %p124 = scmp.lt.s32.totalorder %s17, 16
      // Predicated region
      $region13: #{tpu_custom_call.1} parent=5 // pred_check
        %p125 = pneg %p124
      $region14: #{tpu_custom_call.1} parent=5 // pred_check_branch
        %127 = sbr.rel (%p125) target = $region16
      $region15: #{tpu_custom_call.1} parent=5 // pred_region
        // Predicated region
        $region17: #{tpu_custom_call.1} parent=15 // pred_check
          %p128 = pneg %p49
        $region18: #{tpu_custom_call.1} parent=15 // pred_check_branch
          %130 = sbr.rel (%p128) target = $region20
        $region19: #{tpu_custom_call.1} parent=15 // pred_region
          %s131 = sand.u32 %s39, 1
          %s132 = scalar_lea.sflag [#allocation3], %s131
          %s133 = sand.u32 %s39, 1
          %s134 = smul.addr %s133, 128
          %s135 = scalar_lea.vmem [#allocation2], %s134
          %s136 = smul.u32 32, %s24
          %s138 = ssub.s32 2048, 2048
          %139 = vsyncadd %s132, %s138
          %s140 = smul.addr %s136, 64
          %s141 = scalar_lea.hbm %s0, %s140
          %s142 = sshll.u32 %s135, 4
          %s143 = int_to_ptr.vmem [resolvable:$true] %s142
          %148 = dma.hbm_to_vmem [thread:$0]  %s141, 2048, %s143, %s132, 64, 64, 4
        $region20: #{tpu_custom_call.1} parent=15 // pred_fallthru
          _
        // Predicated region
        $region21: #{tpu_custom_call.1} parent=15 // pred_check
          %p149 = pneg %p75
        $region22: #{tpu_custom_call.1} parent=15 // pred_check_branch
          %151 = sbr.rel (%p149) target = $region24
        $region23: #{tpu_custom_call.1} parent=15 // pred_region
          %s152 = sand.u32 %s65, 1
          %s153 = scalar_lea.sflag [#allocation6], %s152
          %s154 = sand.u32 %s65, 1
          %s155 = smul.addr %s154, 64
          %s156 = scalar_lea.vmem [#allocation5], %s155
          %s158 = ssub.s32 1024, 1024
          %159 = vsyncadd %s153, %s158
          %s160 = smul.addr %s25, 64
          %s161 = scalar_lea.hbm %s1, %s160
          %s162 = sshll.u32 %s156, 4
          %s163 = int_to_ptr.vmem [resolvable:$true] %s162
          %168 = dma.hbm_to_vmem [thread:$0]  %s161, 1024, %s163, %s153, 256, 64, 4
        $region24: #{tpu_custom_call.1} parent=15 // pred_fallthru
          _
      $region16: #{tpu_custom_call.1} parent=5 // pred_fallthru
        _
      %p169 = scmp.le.s32.totalorder 1, %s17
      %p170 = scmp.lt.s32.totalorder %s17, 17
      %p171 = pnand %p169, %p170
      %p172 = pneg %p171
      // Predicated region
      $region25: #{tpu_custom_call.1} parent=5 // pred_check
        _
      $region26: #{tpu_custom_call.1} parent=5 // pred_check_branch
        %174 = sbr.rel (%p171) target = $region28
      $region27: #{tpu_custom_call.1} parent=5 // pred_region
        %s175 = ssub.s32 %s17, 1
        %s176 = sand.u32 %s42, 1
        %s177 = scalar_lea.sflag [#allocation3], %s176
        %s178 = sand.u32 %s42, 1
        %s179 = smul.addr %s178, 128
        %s180 = scalar_lea.vmem [#allocation2], %s179
        // Predicated region
        $region29: #{tpu_custom_call.1} parent=27 // pred_check
          %p181 = pneg %p55
        $region30: #{tpu_custom_call.1} parent=27 // pred_check_branch
          %183 = sbr.rel (%p181) target = $region32
        $region31: #{tpu_custom_call.1} parent=27 // pred_region
          %184 = dma.done %s177, 2048
        $region32: #{tpu_custom_call.1} parent=27 // pred_fallthru
          _
        %s185 = sand.u32 %s68, 1
        %s186 = scalar_lea.sflag [#allocation6], %s185
        %s187 = sand.u32 %s68, 1
        %s188 = smul.addr %s187, 64
        %s189 = scalar_lea.vmem [#allocation5], %s188
        // Predicated region
        $region33: #{tpu_custom_call.1} parent=27 // pred_check
          %p190 = pneg %p81
        $region34: #{tpu_custom_call.1} parent=27 // pred_check_branch
          %192 = sbr.rel (%p190) target = $region36
        $region35: #{tpu_custom_call.1} parent=27 // pred_region
          %193 = dma.done %s186, 1024
        $region36: #{tpu_custom_call.1} parent=27 // pred_fallthru
          _
        %s194 = sand.u32 %s42, 1
        %s195 = scalar_lea.sflag [#allocation3], %s194
        %s196 = sand.u32 %s42, 1
        %s197 = smul.addr %s196, 128
        %s198 = scalar_lea.vmem [#allocation2], %s197
        %p199 = pneg %p55
        %p200 = pneg %p52
        %s201 = sand.u32 %s68, 1
        %s202 = scalar_lea.sflag [#allocation6], %s201
        %s203 = sand.u32 %s68, 1
        %s204 = smul.addr %s203, 64
        %s205 = scalar_lea.vmem [#allocation5], %s204
        %p206 = pneg %p81
        %p207 = pneg %p78
        %p208 = pneg %p109
        %p209 = pneg %p106
        %s210 = sand.u32 %s96, 1
        %s211 = scalar_lea.sflag [#allocation4], %s210
        %s212 = sand.u32 %s96, 1
        %s213 = smul.addr %s212, 128
        %s214 = scalar_lea.vmem [#allocation7], %s213
        %s215 = smul.u32 32, %s26
        %s216 = smul.u32 32, %s26
        %v218 = vld [vmem:[%s180] sm:$0xf]
        %v219 = vld [vmem:[%s180 + $0x4] sm:$0xf]
        %v220 = vld [vmem:[%s180 + $0x8] sm:$0xf]
        %v221 = vld [vmem:[%s180 + $0xc] sm:$0xf]
        %v222 = vld [vmem:[%s180 + $0x10] sm:$0xf]
        %v223 = vld [vmem:[%s180 + $0x14] sm:$0xf]
        %v224 = vld [vmem:[%s180 + $0x18] sm:$0xf]
        %v225 = vld [vmem:[%s180 + $0x1c] sm:$0xf]
        %v226 = vld [vmem:[%s180 + $0x20] sm:$0xf]
        %v227 = vld [vmem:[%s180 + $0x24] sm:$0xf]
        %v228 = vld [vmem:[%s180 + $0x28] sm:$0xf]
        %v229 = vld [vmem:[%s180 + $0x2c] sm:$0xf]
        %v230 = vld [vmem:[%s180 + $0x30] sm:$0xf]
        %v231 = vld [vmem:[%s180 + $0x34] sm:$0xf]
        %v232 = vld [vmem:[%s180 + $0x38] sm:$0xf]
        %v233 = vld [vmem:[%s180 + $0x3c] sm:$0xf]
        %v234 = vld [vmem:[%s180 + $0x40] sm:$0xf]
        %v235 = vld [vmem:[%s180 + $0x44] sm:$0xf]
        %v236 = vld [vmem:[%s180 + $0x48] sm:$0xf]
        %v237 = vld [vmem:[%s180 + $0x4c] sm:$0xf]
        %v238 = vld [vmem:[%s180 + $0x50] sm:$0xf]
        %v239 = vld [vmem:[%s180 + $0x54] sm:$0xf]
        %v240 = vld [vmem:[%s180 + $0x58] sm:$0xf]
        %v241 = vld [vmem:[%s180 + $0x5c] sm:$0xf]
        %v242 = vld [vmem:[%s180 + $0x60] sm:$0xf]
        %v243 = vld [vmem:[%s180 + $0x64] sm:$0xf]
        %v244 = vld [vmem:[%s180 + $0x68] sm:$0xf]
        %v245 = vld [vmem:[%s180 + $0x6c] sm:$0xf]
        %v246 = vld [vmem:[%s180 + $0x70] sm:$0xf]
        %v247 = vld [vmem:[%s180 + $0x74] sm:$0xf]
        %v248 = vld [vmem:[%s180 + $0x78] sm:$0xf]
        %v249 = vld [vmem:[%s180 + $0x7c] sm:$0xf]
        %v250 = vld [vmem:[%s189] sm:$0xf]
        %v251 = vld [vmem:[%s189 + $0x4] sm:$0xf]
        %v252 = vld [vmem:[%s189 + $0x8] sm:$0xf]
        %v253 = vld [vmem:[%s189 + $0xc] sm:$0xf]
        %v254 = vld [vmem:[%s189 + $0x10] sm:$0xf]
        %v255 = vld [vmem:[%s189 + $0x14] sm:$0xf]
        %v256 = vld [vmem:[%s189 + $0x18] sm:$0xf]
        %v257 = vld [vmem:[%s189 + $0x1c] sm:$0xf]
        %v258 = vld [vmem:[%s189 + $0x20] sm:$0xf]
        %v259 = vld [vmem:[%s189 + $0x24] sm:$0xf]
        %v260 = vld [vmem:[%s189 + $0x28] sm:$0xf]
        %v261 = vld [vmem:[%s189 + $0x2c] sm:$0xf]
        %v262 = vld [vmem:[%s189 + $0x30] sm:$0xf]
        %v263 = vld [vmem:[%s189 + $0x34] sm:$0xf]
        %v264 = vld [vmem:[%s189 + $0x38] sm:$0xf]
        %v265 = vld [vmem:[%s189 + $0x3c] sm:$0xf]
        %v298 = vunpack.c.l.b16 %v218
        %v299 = vunpack.c.l.b16 %v219
        %v300 = vunpack.c.l.b16 %v220
        %v301 = vunpack.c.l.b16 %v221
        %v302 = vunpack.c.l.b16 %v222
        %v303 = vunpack.c.l.b16 %v223
        %v304 = vunpack.c.l.b16 %v224
        %v305 = vunpack.c.l.b16 %v225
        %v306 = vunpack.c.l.b16 %v226
        %v307 = vunpack.c.l.b16 %v227
        %v308 = vunpack.c.l.b16 %v228
        %v309 = vunpack.c.l.b16 %v229
        %v310 = vunpack.c.l.b16 %v230
        %v311 = vunpack.c.l.b16 %v231
        %v312 = vunpack.c.l.b16 %v232
        %v313 = vunpack.c.l.b16 %v233
        %v314 = vunpack.c.l.b16 %v234
        %v315 = vunpack.c.l.b16 %v235
        %v316 = vunpack.c.l.b16 %v236
        %v317 = vunpack.c.l.b16 %v237
        %v318 = vunpack.c.l.b16 %v238
        %v319 = vunpack.c.l.b16 %v239
        %v320 = vunpack.c.l.b16 %v240
        %v321 = vunpack.c.l.b16 %v241
        %v322 = vunpack.c.l.b16 %v242
        %v323 = vunpack.c.l.b16 %v243
        %v324 = vunpack.c.l.b16 %v244
        %v325 = vunpack.c.l.b16 %v245
        %v326 = vunpack.c.l.b16 %v246
        %v327 = vunpack.c.l.b16 %v247
        %v328 = vunpack.c.l.b16 %v248
        %v329 = vunpack.c.l.b16 %v249
        %v330 = vpack.c.b16 %v299, %v298
        %v331 = vpack.c.b16 %v301, %v300
        %v332 = vpack.c.b16 %v303, %v302
        %v333 = vpack.c.b16 %v305, %v304
        %v334 = vpack.c.b16 %v307, %v306
        %v335 = vpack.c.b16 %v309, %v308
        %v336 = vpack.c.b16 %v311, %v310
        %v337 = vpack.c.b16 %v313, %v312
        %v338 = vpack.c.b16 %v315, %v314
        %v339 = vpack.c.b16 %v317, %v316
        %v340 = vpack.c.b16 %v319, %v318
        %v341 = vpack.c.b16 %v321, %v320
        %v342 = vpack.c.b16 %v323, %v322
        %v343 = vpack.c.b16 %v325, %v324
        %v344 = vpack.c.b16 %v327, %v326
        %v345 = vpack.c.b16 %v329, %v328
        %v378 = vunpack.c.l.b16 %v250
        %v379 = vunpack.c.l.b16 %v251
        %v380 = vunpack.c.l.b16 %v252
        %v381 = vunpack.c.l.b16 %v253
        %v382 = vunpack.c.l.b16 %v254
        %v383 = vunpack.c.l.b16 %v255
        %v384 = vunpack.c.l.b16 %v256
        %v385 = vunpack.c.l.b16 %v257
        %v386 = vunpack.c.l.b16 %v258
        %v387 = vunpack.c.l.b16 %v259
        %v388 = vunpack.c.l.b16 %v260
        %v389 = vunpack.c.l.b16 %v261
        %v390 = vunpack.c.l.b16 %v262
        %v391 = vunpack.c.l.b16 %v263
        %v392 = vunpack.c.l.b16 %v264
        %v393 = vunpack.c.l.b16 %v265
        %v394 = vpack.c.b16 %v379, %v378
        %v395 = vpack.c.b16 %v381, %v380
        %v396 = vpack.c.b16 %v383, %v382
        %v397 = vpack.c.b16 %v385, %v384
        %v398 = vpack.c.b16 %v387, %v386
        %v399 = vpack.c.b16 %v389, %v388
        %v400 = vpack.c.b16 %v391, %v390
        %v401 = vpack.c.b16 %v393, %v392
        %410 = vmatprep.subr.bf16.mxu0 0
        %411 = vmatpush1.bf16.msra.mxu0 %v401
        %412 = vmatprep.subr.bf16.mxu0 0
        %413 = vmatpush1.bf16.msra.mxu0 %v400
        %414 = vmatprep.subr.bf16.mxu0 0
        %415 = vmatpush1.bf16.msra.mxu0 %v399
        %416 = vmatprep.subr.bf16.mxu0 0
        %417 = vmatpush1.bf16.msra.mxu0 %v398
        %418 = vmatprep.subr.bf16.mxu0 0
        %419 = vmatpush1.bf16.msra.mxu0 %v397
        %420 = vmatprep.subr.bf16.mxu0 0
        %421 = vmatpush1.bf16.msra.mxu0 %v396
        %422 = vmatprep.subr.bf16.mxu0 0
        %423 = vmatpush1.bf16.msra.mxu0 %v395
        %424 = vmatprep.subr.bf16.mxu0 0
        %425 = vmatpush1.bf16.msra.mxu0 %v394
        %426 = vmatprep.subr.bf16.mxu0 0
        %427 = vmatpush2.bf16.msra.mxu0 0
        %428 = vmatprep.subr.bf16.mxu0 0
        %429 = vmatpush2.bf16.msra.mxu0 0
        %430 = vmatprep.subr.bf16.mxu0 0
        %431 = vmatpush2.bf16.msra.mxu0 0
        %432 = vmatprep.subr.bf16.mxu0 0
        %433 = vmatpush2.bf16.msra.mxu0 0
        %434 = vmatprep.subr.bf16.mxu0 0
        %435 = vmatpush2.bf16.msra.mxu0 0
        %436 = vmatprep.subr.bf16.mxu0 0
        %437 = vmatpush2.bf16.msra.mxu0 0
        %438 = vmatprep.subr.bf16.mxu0 0
        %439 = vmatpush2.bf16.msra.mxu0 0
        %440 = vmatprep.subr.bf16.mxu0 0
        %441 = vmatpush2.bf16.msra.mxu0 0
        %442 = vmatprep.mubr.bf16.mxu0 0
        %443 = vmatmul.mubr.bf16.gmra.mxu0 %v330
        %v444 = vpop.f32.mrf.mxu0
        %v445 = vadd.f32 0.0, %v444
        %v446 = vpop.f32.mrf.mxu0
        %v447 = vpop.f32.mrf.mxu0
        %v448 = vadd.f32 0.0, %v447
        %v449 = vpop.f32.mrf.mxu0
        %450 = vmatprep.mubr.bf16.mxu0 0
        %451 = vmatmul.mubr.bf16.gmra.mxu0 %v331
        %v452 = vpop.f32.mrf.mxu0
        %v453 = vadd.f32 0.0, %v452
        %v454 = vpop.f32.mrf.mxu0
        %v455 = vpop.f32.mrf.mxu0
        %v456 = vadd.f32 0.0, %v455
        %v457 = vpop.f32.mrf.mxu0
        %458 = vmatprep.mubr.bf16.mxu0 0
        %459 = vmatmul.mubr.bf16.gmra.mxu0 %v332
        %v460 = vpop.f32.mrf.mxu0
        %v461 = vadd.f32 0.0, %v460
        %v462 = vpop.f32.mrf.mxu0
        %v463 = vpop.f32.mrf.mxu0
        %v464 = vadd.f32 0.0, %v463
        %v465 = vpop.f32.mrf.mxu0
        %466 = vmatprep.mubr.bf16.mxu0 0
        %467 = vmatmul.mubr.bf16.gmra.mxu0 %v333
        %v468 = vpop.f32.mrf.mxu0
        %v469 = vadd.f32 0.0, %v468
        %v470 = vpop.f32.mrf.mxu0
        %v471 = vpop.f32.mrf.mxu0
        %v472 = vadd.f32 0.0, %v471
        %v473 = vpop.f32.mrf.mxu0
        %474 = vmatprep.mubr.bf16.mxu0 0
        %475 = vmatmul.mubr.bf16.gmra.mxu0 %v334
        %v476 = vpop.f32.mrf.mxu0
        %v477 = vadd.f32 0.0, %v476
        %v478 = vpop.f32.mrf.mxu0
        %v479 = vpop.f32.mrf.mxu0
        %v480 = vadd.f32 0.0, %v479
        %v481 = vpop.f32.mrf.mxu0
        %482 = vmatprep.mubr.bf16.mxu0 0
        %483 = vmatmul.mubr.bf16.gmra.mxu0 %v335
        %v484 = vpop.f32.mrf.mxu0
        %v485 = vadd.f32 0.0, %v484
        %v486 = vpop.f32.mrf.mxu0
        %v487 = vpop.f32.mrf.mxu0
        %v488 = vadd.f32 0.0, %v487
        %v489 = vpop.f32.mrf.mxu0
        %490 = vmatprep.mubr.bf16.mxu0 0
        %491 = vmatmul.mubr.bf16.gmra.mxu0 %v336
        %v492 = vpop.f32.mrf.mxu0
        %v493 = vadd.f32 0.0, %v492
        %v494 = vpop.f32.mrf.mxu0
        %v495 = vpop.f32.mrf.mxu0
        %v496 = vadd.f32 0.0, %v495
        %v497 = vpop.f32.mrf.mxu0
        %498 = vmatprep.mubr.bf16.mxu0 0
        %499 = vmatmul.mubr.bf16.gmra.mxu0 %v337
        %v500 = vpop.f32.mrf.mxu0
        %v501 = vadd.f32 0.0, %v500
        %v502 = vpop.f32.mrf.mxu0
        %v503 = vpop.f32.mrf.mxu0
        %v504 = vadd.f32 0.0, %v503
        %v505 = vpop.f32.mrf.mxu0
        %506 = vmatprep.mubr.bf16.mxu0 0
        %507 = vmatmul.mubr.bf16.gmra.mxu0 %v338
        %v508 = vpop.f32.mrf.mxu0
        %v509 = vadd.f32 0.0, %v508
        %v510 = vpop.f32.mrf.mxu0
        %v511 = vpop.f32.mrf.mxu0
        %v512 = vadd.f32 0.0, %v511
        %v513 = vpop.f32.mrf.mxu0
        %514 = vmatprep.mubr.bf16.mxu0 0
        %515 = vmatmul.mubr.bf16.gmra.mxu0 %v339
        %v516 = vpop.f32.mrf.mxu0
        %v517 = vadd.f32 0.0, %v516
        %v518 = vpop.f32.mrf.mxu0
        %v519 = vpop.f32.mrf.mxu0
        %v520 = vadd.f32 0.0, %v519
        %v521 = vpop.f32.mrf.mxu0
        %522 = vmatprep.mubr.bf16.mxu0 0
        %523 = vmatmul.mubr.bf16.gmra.mxu0 %v340
        %v524 = vpop.f32.mrf.mxu0
        %v525 = vadd.f32 0.0, %v524
        %v526 = vpop.f32.mrf.mxu0
        %v527 = vpop.f32.mrf.mxu0
        %v528 = vadd.f32 0.0, %v527
        %v529 = vpop.f32.mrf.mxu0
        %530 = vmatprep.mubr.bf16.mxu0 0
        %531 = vmatmul.mubr.bf16.gmra.mxu0 %v341
        %v532 = vpop.f32.mrf.mxu0
        %v533 = vadd.f32 0.0, %v532
        %v534 = vpop.f32.mrf.mxu0
        %v535 = vpop.f32.mrf.mxu0
        %v536 = vadd.f32 0.0, %v535
        %v537 = vpop.f32.mrf.mxu0
        %538 = vmatprep.mubr.bf16.mxu0 0
        %539 = vmatmul.mubr.bf16.gmra.mxu0 %v342
        %v540 = vpop.f32.mrf.mxu0
        %v541 = vadd.f32 0.0, %v540
        %v542 = vpop.f32.mrf.mxu0
        %v543 = vpop.f32.mrf.mxu0
        %v544 = vadd.f32 0.0, %v543
        %v545 = vpop.f32.mrf.mxu0
        %546 = vmatprep.mubr.bf16.mxu0 0
        %547 = vmatmul.mubr.bf16.gmra.mxu0 %v343
        %v548 = vpop.f32.mrf.mxu0
        %v549 = vadd.f32 0.0, %v548
        %v550 = vpop.f32.mrf.mxu0
        %v551 = vpop.f32.mrf.mxu0
        %v552 = vadd.f32 0.0, %v551
        %v553 = vpop.f32.mrf.mxu0
        %554 = vmatprep.mubr.bf16.mxu0 0
        %555 = vmatmul.mubr.bf16.gmra.mxu0 %v344
        %v556 = vpop.f32.mrf.mxu0
        %v557 = vadd.f32 0.0, %v556
        %v558 = vpop.f32.mrf.mxu0
        %v559 = vpop.f32.mrf.mxu0
        %v560 = vadd.f32 0.0, %v559
        %v561 = vpop.f32.mrf.mxu0
        %562 = vmatprep.mubr.bf16.mxu0 0
        %563 = vmatmul.mubr.bf16.gmra.mxu0 %v345
        %v564 = vpop.f32.mrf.mxu0
        %v565 = vadd.f32 0.0, %v564
        %v566 = vpop.f32.mrf.mxu0
        %v567 = vpop.f32.mrf.mxu0
        %v568 = vadd.f32 0.0, %v567
        %v569 = vpop.f32.mrf.mxu0
        %570 = vdwg.mxu0
        %v571 = vpack.c.bf16 %v448, %v445
        %v572 = vpack.c.bf16 %v456, %v453
        %v573 = vpack.c.bf16 %v464, %v461
        %v574 = vpack.c.bf16 %v472, %v469
        %v575 = vpack.c.bf16 %v480, %v477
        %v576 = vpack.c.bf16 %v488, %v485
        %v577 = vpack.c.bf16 %v496, %v493
        %v578 = vpack.c.bf16 %v504, %v501
        %v579 = vpack.c.bf16 %v512, %v509
        %v580 = vpack.c.bf16 %v520, %v517
        %v581 = vpack.c.bf16 %v528, %v525
        %v582 = vpack.c.bf16 %v536, %v533
        %v583 = vpack.c.bf16 %v544, %v541
        %v584 = vpack.c.bf16 %v552, %v549
        %v585 = vpack.c.bf16 %v560, %v557
        %v586 = vpack.c.bf16 %v568, %v565
        %v603 = vunpack.c.l.b16 %v571
        %v604 = vunpack.c.h.b16 %v571
        %v605 = vunpack.c.l.b16 %v572
        %v606 = vunpack.c.h.b16 %v572
        %v607 = vunpack.c.l.b16 %v573
        %v608 = vunpack.c.h.b16 %v573
        %v609 = vunpack.c.l.b16 %v574
        %v610 = vunpack.c.h.b16 %v574
        %v611 = vunpack.c.l.b16 %v575
        %v612 = vunpack.c.h.b16 %v575
        %v613 = vunpack.c.l.b16 %v576
        %v614 = vunpack.c.h.b16 %v576
        %v615 = vunpack.c.l.b16 %v577
        %v616 = vunpack.c.h.b16 %v577
        %v617 = vunpack.c.l.b16 %v578
        %v618 = vunpack.c.h.b16 %v578
        %v619 = vunpack.c.l.b16 %v579
        %v620 = vunpack.c.h.b16 %v579
        %v621 = vunpack.c.l.b16 %v580
        %v622 = vunpack.c.h.b16 %v580
        %v623 = vunpack.c.l.b16 %v581
        %v624 = vunpack.c.h.b16 %v581
        %v625 = vunpack.c.l.b16 %v582
        %v626 = vunpack.c.h.b16 %v582
        %v627 = vunpack.c.l.b16 %v583
        %v628 = vunpack.c.h.b16 %v583
        %v629 = vunpack.c.l.b16 %v584
        %v630 = vunpack.c.h.b16 %v584
        %v631 = vunpack.c.l.b16 %v585
        %v632 = vunpack.c.h.b16 %v585
        %v633 = vunpack.c.l.b16 %v586
        %v634 = vunpack.c.h.b16 %v586
        %v635 = vpack.c.b16 %v603, %v603
        %v636 = vpack.c.b16 %v604, %v604
        %v637 = vpack.c.b16 %v605, %v605
        %v638 = vpack.c.b16 %v606, %v606
        %v639 = vpack.c.b16 %v607, %v607
        %v640 = vpack.c.b16 %v608, %v608
        %v641 = vpack.c.b16 %v609, %v609
        %v642 = vpack.c.b16 %v610, %v610
        %v643 = vpack.c.b16 %v611, %v611
        %v644 = vpack.c.b16 %v612, %v612
        %v645 = vpack.c.b16 %v613, %v613
        %v646 = vpack.c.b16 %v614, %v614
        %v647 = vpack.c.b16 %v615, %v615
        %v648 = vpack.c.b16 %v616, %v616
        %v649 = vpack.c.b16 %v617, %v617
        %v650 = vpack.c.b16 %v618, %v618
        %v651 = vpack.c.b16 %v619, %v619
        %v652 = vpack.c.b16 %v620, %v620
        %v653 = vpack.c.b16 %v621, %v621
        %v654 = vpack.c.b16 %v622, %v622
        %v655 = vpack.c.b16 %v623, %v623
        %v656 = vpack.c.b16 %v624, %v624
        %v657 = vpack.c.b16 %v625, %v625
        %v658 = vpack.c.b16 %v626, %v626
        %v659 = vpack.c.b16 %v627, %v627
        %v660 = vpack.c.b16 %v628, %v628
        %v661 = vpack.c.b16 %v629, %v629
        %v662 = vpack.c.b16 %v630, %v630
        %v663 = vpack.c.b16 %v631, %v631
        %v664 = vpack.c.b16 %v632, %v632
        %v665 = vpack.c.b16 %v633, %v633
        %v666 = vpack.c.b16 %v634, %v634
        %699 = vst [vmem:[%s214] sm:$0xf] %v635
        %700 = vst [vmem:[%s214 + $0x4] sm:$0xf] %v636
        %701 = vst [vmem:[%s214 + $0x8] sm:$0xf] %v637
        %702 = vst [vmem:[%s214 + $0xc] sm:$0xf] %v638
        %703 = vst [vmem:[%s214 + $0x10] sm:$0xf] %v639
        %704 = vst [vmem:[%s214 + $0x14] sm:$0xf] %v640
        %705 = vst [vmem:[%s214 + $0x18] sm:$0xf] %v641
        %706 = vst [vmem:[%s214 + $0x1c] sm:$0xf] %v642
        %707 = vst [vmem:[%s214 + $0x20] sm:$0xf] %v643
        %708 = vst [vmem:[%s214 + $0x24] sm:$0xf] %v644
        %709 = vst [vmem:[%s214 + $0x28] sm:$0xf] %v645
        %710 = vst [vmem:[%s214 + $0x2c] sm:$0xf] %v646
        %711 = vst [vmem:[%s214 + $0x30] sm:$0xf] %v647
        %712 = vst [vmem:[%s214 + $0x34] sm:$0xf] %v648
        %713 = vst [vmem:[%s214 + $0x38] sm:$0xf] %v649
        %714 = vst [vmem:[%s214 + $0x3c] sm:$0xf] %v650
        %715 = vst [vmem:[%s214 + $0x40] sm:$0xf] %v651
        %716 = vst [vmem:[%s214 + $0x44] sm:$0xf] %v652
        %717 = vst [vmem:[%s214 + $0x48] sm:$0xf] %v653
        %718 = vst [vmem:[%s214 + $0x4c] sm:$0xf] %v654
        %719 = vst [vmem:[%s214 + $0x50] sm:$0xf] %v655
        %720 = vst [vmem:[%s214 + $0x54] sm:$0xf] %v656
        %721 = vst [vmem:[%s214 + $0x58] sm:$0xf] %v657
        %722 = vst [vmem:[%s214 + $0x5c] sm:$0xf] %v658
        %723 = vst [vmem:[%s214 + $0x60] sm:$0xf] %v659
        %724 = vst [vmem:[%s214 + $0x64] sm:$0xf] %v660
        %725 = vst [vmem:[%s214 + $0x68] sm:$0xf] %v661
        %726 = vst [vmem:[%s214 + $0x6c] sm:$0xf] %v662
        %727 = vst [vmem:[%s214 + $0x70] sm:$0xf] %v663
        %728 = vst [vmem:[%s214 + $0x74] sm:$0xf] %v664
        %729 = vst [vmem:[%s214 + $0x78] sm:$0xf] %v665
        %730 = vst [vmem:[%s214 + $0x7c] sm:$0xf] %v666
        %s731 = sand.u32 %s96, 1
        %s732 = scalar_lea.sflag [#allocation4], %s731
        %s733 = sand.u32 %s96, 1
        %s734 = smul.addr %s733, 128
        %s735 = scalar_lea.vmem [#allocation7], %s734
        // Predicated region
        $region37: #{tpu_custom_call.1} parent=27 // pred_check
          %p736 = pneg %p106
        $region38: #{tpu_custom_call.1} parent=27 // pred_check_branch
          %738 = sbr.rel (%p736) target = $region40
        $region39: #{tpu_custom_call.1} parent=27 // pred_region
          %s739 = smul.u32 32, %s26
          %s741 = ssub.s32 2048, 2048
          %742 = vsyncadd %s732, %s741
          %s743 = smul.addr %s739, 4
          %s744 = sadd.s32 %s27, %s743
          %s745 = smul.addr %s744, 64
          %s746 = scalar_lea.hbm %s2, %s745
          %s747 = sshll.u32 %s735, 4
          %s748 = int_to_ptr.vmem [resolvable:$true] %s747
          %753 = dma.vmem_to_hbm [thread:$0]  %s748, 2048, %s746, %s732, 64, 256, 4
        $region40: #{tpu_custom_call.1} parent=27 // pred_fallthru
          _
      $region28: #{tpu_custom_call.1} parent=5 // pred_fallthru
        _
      %p754 = scmp.le.s32.totalorder 2, %s17
      // Predicated region
      $region41: #{tpu_custom_call.1} parent=5 // pred_check
        %p755 = pneg %p754
      $region42: #{tpu_custom_call.1} parent=5 // pred_check_branch
        %757 = sbr.rel (%p755) target = $region44
      $region43: #{tpu_custom_call.1} parent=5 // pred_region
        %s758 = ssub.s32 %s17, 2
        // Predicated region
        $region45: #{tpu_custom_call.1} parent=43 // pred_check
          %p759 = pneg %p112
        $region46: #{tpu_custom_call.1} parent=43 // pred_check_branch
          %761 = sbr.rel (%p759) target = $region48
        $region47: #{tpu_custom_call.1} parent=43 // pred_region
          %s762 = sand.u32 %s97, 1
          %s763 = scalar_lea.sflag [#allocation4], %s762
          %s764 = sand.u32 %s97, 1
          %s765 = smul.addr %s764, 128
          %s766 = scalar_lea.vmem [#allocation7], %s765
          %767 = dma.done %s763, 2048
        $region48: #{tpu_custom_call.1} parent=43 // pred_fallthru
          _
      $region44: #{tpu_custom_call.1} parent=5 // pred_fallthru
        _
    $region6: #{tpu_custom_call.1} parent=1 // loop_footer
      %s21 = sadd.s32 1, %s17
    $region7: #{tpu_custom_call.1} parent=1 // loop_footer_branch
      %16 = sbr.rel target = $region3
    $region8: #{tpu_custom_call.1} parent=1 // loop_exit
      _
    %768 = vsyncpa [#allocation3], 1
    %s769 = scalar_lea.sflag [#allocation3], 1
    %770 = vsyncpa %s769, 1
    %771 = vsyncpa [#allocation6], 1
    %s772 = scalar_lea.sflag [#allocation6], 1
    %773 = vsyncpa %s772, 1
    %774 = vsyncpa [#allocation4], 1
    %s775 = scalar_lea.sflag [#allocation4], 1
    %776 = vsyncpa %s775, 1

</llo_original>
